<compile_context>
chip_gen: v7x
topology: tpu7x:2x2x1
jax: 0.10.0
libtpu: 0.0.40
codegen_flags: <defaults>
</compile_context>

<pallas_src>
import functools

import jax
import jax.numpy as jnp
from jax import lax
from jax.experimental import pallas as pl
from jax.experimental.pallas import tpu as pltpu

LANES = 128
DEFAULT_BLOCK_ROWS = 4096      # (4096, 128) f32 tile = 2 MiB / input / step


def _round_up(x, m):
    return ((x + m - 1) // m) * m


def _detect_num_tensorcores():
    """Best-effort TensorCore count (v7x: 2). Falls back to 1 (v5e/v6e)."""
    try:
        info = pltpu.get_tpu_info()
        for name in ("num_cores", "num_tensorcores", "tensorcores_per_chip",
                     "cores_per_chip", "core_count"):
            v = getattr(info, name, None)
            if isinstance(v, int) and v >= 1:
                return v
    except Exception:
        pass
    return 1


def _dice_partial_kernel(bpc, rows, block_rows, full_blocks, needs_mask,
                         x_ref, t_ref, inter_ref, total_ref,
                         acc_inter, acc_total):
    """Accumulates per-core (8,128) partials of sigmoid(x)*t and sigmoid(x)+t.

    Grid is (core_split, row_block).  Accumulators are reset at the start of
    each core segment and stored to the per-core output at its end.
    """
    i = pl.program_id(1)

    @pl.when(i == 0)
    def _init():
        acc_inter[...] = jnp.zeros_like(acc_inter)
        acc_total[...] = jnp.zeros_like(acc_total)

    x = x_ref[...].astype(jnp.float32)
    t = t_ref[...].astype(jnp.float32)
    # Single EUP transcendental; clamp(0,1) of the original module is a no-op.
    s = 0.5 * jnp.tanh(0.5 * x) + 0.5
    prod = s * t
    summ = s + t                       # sum(s) + sum(t) == sum(s + t)

    def _accumulate(p, q):
        # (block_rows,128) -> (block_rows//8, 8, 128): each (8,128) slab is one
        # vreg, so the axis-0 sum is pure vreg adds into a one-vreg accumulator.
        acc_inter[...] += jnp.sum(p.reshape(-1, 8, LANES), axis=0)
        acc_total[...] += jnp.sum(q.reshape(-1, 8, LANES), axis=0)

    if needs_mask:
        c = pl.program_id(0)
        logical_block = c * bpc + i
        is_full = logical_block < full_blocks

        @pl.when(is_full)
        def _full():
            _accumulate(prod, summ)

        @pl.when(jnp.logical_not(is_full))
        def _tail():
            # Ragged final block and/or clamped duplicate block on the last
            # core split: zero out rows past the logical end of the data.
            row = lax.broadcasted_iota(jnp.int32, (block_rows, LANES), 0)
            valid = (logical_block * block_rows + row) < rows
            _accumulate(jnp.where(valid, prod, 0.0),
                        jnp.where(valid, summ, 0.0))
    else:
        _accumulate(prod, summ)

    @pl.when(i == pl.num_programs(1) - 1)
    def _finalize():
        inter_ref[0] = acc_inter[...]
        total_ref[0] = acc_total[...]


def dice_loss(inputs, targets, smooth=1.0, *, core_splits=None, block_rows=None):
    """Pallas implementation of DiceLoss.forward.  Returns a scalar f32."""
    x = inputs.reshape(-1)
    t = targets.reshape(-1)
    n = x.shape[0]

    # Lane-aligned prefix handled by the kernel; the <=127-element tail is
    # folded in with plain JAX below (no full-array pad copy is issued).
    n_main = (n // LANES) * LANES
    tail = n - n_main

    inter = jnp.float32(0.0)
    total = jnp.float32(0.0)

    if n_main > 0:
        xm = x[:n_main] if tail else x
        tm = t[:n_main] if tail else t
        rows = n_main // LANES
        x2 = xm.reshape(rows, LANES)        # zero-copy in the aligned case
        t2 = tm.reshape(rows, LANES)

        if block_rows is None:
            block_rows = min(DEFAULT_BLOCK_ROWS, _round_up(rows, 16))
        num_blocks = pl.cdiv(rows, block_rows)

        splits = core_splits if core_splits is not None else _detect_num_tensorcores()
        splits = max(1, min(int(splits), num_blocks))
        bpc = pl.cdiv(num_blocks, splits)            # row-blocks per core split
        full_blocks = rows // block_rows
        needs_mask = (rows % block_rows != 0) or (splits * bpc != num_blocks)

        if splits > 1:
            core_dim = getattr(pltpu, "CORE_PARALLEL", None)
            dims = (core_dim if core_dim is not None else "parallel", "arbitrary")
        else:
            dims = ("arbitrary", "arbitrary")

        def in_map(c, i):
            # Clamp so an over-hanging block on the last core split re-reads a
            # valid block; its contribution is zeroed by the in-kernel mask.
            return (jnp.minimum(c * bpc + i, num_blocks - 1), 0)

        kernel = functools.partial(_dice_partial_kernel, bpc, rows, block_rows,
                                   full_blocks, needs_mask)

        inter_p, total_p = pl.pallas_call(
            kernel,
            out_shape=(
                jax.ShapeDtypeStruct((splits, 8, LANES), jnp.float32),
                jax.ShapeDtypeStruct((splits, 8, LANES), jnp.float32),
            ),
            grid_spec=pltpu.PrefetchScalarGridSpec(
                num_scalar_prefetch=0,
                grid=(splits, bpc),
                in_specs=[
                    pl.BlockSpec((block_rows, LANES), in_map),
                    pl.BlockSpec((block_rows, LANES), in_map),
                ],
                out_specs=[
                    pl.BlockSpec((1, 8, LANES), lambda c, i: (c, 0, 0)),
                    pl.BlockSpec((1, 8, LANES), lambda c, i: (c, 0, 0)),
                ],
                scratch_shapes=[
                    pltpu.VMEM((8, LANES), jnp.float32),
                    pltpu.VMEM((8, LANES), jnp.float32),
                ],
            ),
            compiler_params=pltpu.CompilerParams(dimension_semantics=dims),
        )(x2, t2)

        inter = inter_p.sum()
        total = total_p.sum()

    if tail:
        # <=127 leftover elements: trivial plain-JAX epilogue.
        xt = x[n_main:].astype(jnp.float32)
        tt = t[n_main:].astype(jnp.float32)
        st = jax.nn.sigmoid(xt)
        inter = inter + jnp.sum(st * tt)
        total = total + jnp.sum(st) + jnp.sum(tt)

    dice = (2.0 * inter + smooth) / (total + smooth)
    return 1.0 - dice


def _dice_loss_ref(inputs, targets, smooth=1.0):
    s = jnp.clip(jax.nn.sigmoid(inputs.astype(jnp.float32)), 0.0, 1.0).reshape(-1)
    t = targets.astype(jnp.float32).reshape(-1)
    inter = jnp.sum(s * t)
    dice = (2.0 * inter + smooth) / (jnp.sum(s) + jnp.sum(t) + smooth)
    return 1.0 - dice


if __name__ == "__main__":
    key = jax.random.PRNGKey(0)
    k1, k2, k3, k4 = jax.random.split(key, 4)

    # SAM-style mask loss: NCHW logits + binary targets (128-aligned case).
    inputs = jax.random.normal(k1, (2, 4, 16, 16), dtype=jnp.float32)
    targets = (jax.random.uniform(k2, (2, 4, 16, 16)) > 0.5).astype(jnp.float32)
    loss = jax.block_until_ready(dice_loss(inputs, targets, smooth=1.0))
    ref = _dice_loss_ref(inputs, targets, smooth=1.0)
    assert jnp.allclose(loss, ref, atol=1e-5, rtol=1e-5), (loss, ref)

    # Ragged element count (not a multiple of 128): kernel handles the aligned
    # prefix, the <=127-element tail is folded in with plain JAX (no pad copy).
    inputs2 = jax.random.normal(k3, (2, 3, 17, 19), dtype=jnp.float32)
    targets2 = (jax.random.uniform(k4, (2, 3, 17, 19)) > 0.5).astype(jnp.float32)
    loss2 = jax.block_until_ready(dice_loss(inputs2, targets2, smooth=1.0))
    ref2 = _dice_loss_ref(inputs2, targets2, smooth=1.0)
    assert jnp.allclose(loss2, ref2, atol=1e-5, rtol=1e-5), (loss2, ref2)

    # bf16 logits stream at 2 B/element; the kernel upcasts to f32 internally.
    inputs3 = inputs.astype(jnp.bfloat16)
    loss3 = jax.block_until_ready(dice_loss(inputs3, targets, smooth=1.0))
    ref3 = _dice_loss_ref(inputs3, targets, smooth=1.0)
    assert jnp.allclose(loss3, ref3, atol=1e-4, rtol=1e-4), (loss3, ref3)

    print("KERNEL_OK")
</pallas_src>

<mosaic_0001>
module attributes {stable_mosaic.version = 11 : i64} {
  func.func @_dice_partial_kernel(%arg0: i32, %arg1: i32, %arg2: memref<16x128xf32, #tpu.memory_space<vmem>>, %arg3: memref<16x128xf32, #tpu.memory_space<vmem>>, %arg4: memref<1x8x128xf32, #tpu.memory_space<vmem>>, %arg5: memref<1x8x128xf32, #tpu.memory_space<vmem>>, %arg6: memref<8x128xf32, #tpu.memory_space<vmem>>, %arg7: memref<8x128xf32, #tpu.memory_space<vmem>>) attributes {dimension_semantics = [#tpu.dimension_semantics<arbitrary>, #tpu.dimension_semantics<arbitrary>], iteration_bounds = array<i64: 1, 1>, scalar_prefetch = 0 : i64, scratch_operands = 2 : i64, tpu.core_type = #tpu.core_type<tc>, window_params = [{transform_indices = @transform_0, window_bounds = array<i64: 16, 128>}, {transform_indices = @transform_1, window_bounds = array<i64: 16, 128>}, {transform_indices = @transform_2, window_bounds = array<i64: 1, 8, 128>}, {transform_indices = @transform_3, window_bounds = array<i64: 1, 8, 128>}]} {
    %c0_i32 = arith.constant 0 : i32
    %0 = arith.cmpi eq, %arg1, %c0_i32 : i32
    %1 = arith.extui %0 : i1 to i32
    %c0_i32_0 = arith.constant 0 : i32
    %2 = arith.cmpi ne, %1, %c0_i32_0 : i32
    scf.if %2 {
      %cst_18 = arith.constant 0.000000e+00 : f32
      %27 = vector.broadcast %cst_18 : f32 to vector<8x128xf32>
      %c0_19 = arith.constant 0 : index
      %c0_20 = arith.constant 0 : index
      %28 = vector.load %arg6[%c0_19, %c0_20] : memref<8x128xf32, #tpu.memory_space<vmem>>, vector<8x128xf32>
      tpu.vector_store %arg6[%c0_19, %c0_20], %27 {strides = array<i32>} : memref<8x128xf32, #tpu.memory_space<vmem>>, vector<8x128xf32>,
      %cst_21 = arith.constant 0.000000e+00 : f32
      %29 = vector.broadcast %cst_21 : f32 to vector<8x128xf32>
      %c0_22 = arith.constant 0 : index
      %c0_23 = arith.constant 0 : index
      %30 = vector.load %arg7[%c0_22, %c0_23] : memref<8x128xf32, #tpu.memory_space<vmem>>, vector<8x128xf32>
      tpu.vector_store %arg7[%c0_22, %c0_23], %29 {strides = array<i32>} : memref<8x128xf32, #tpu.memory_space<vmem>>, vector<8x128xf32>,
    } else {
    }
    %c0 = arith.constant 0 : index
    %c0_1 = arith.constant 0 : index
    %3 = vector.load %arg2[%c0, %c0_1] : memref<16x128xf32, #tpu.memory_space<vmem>>, vector<16x128xf32>
    %c0_2 = arith.constant 0 : index
    %c0_3 = arith.constant 0 : index
    %4 = vector.load %arg3[%c0_2, %c0_3] : memref<16x128xf32, #tpu.memory_space<vmem>>, vector<16x128xf32>
    %cst = arith.constant 5.000000e-01 : f32
    %5 = vector.broadcast %cst : f32 to vector<16x128xf32>
    %6 = arith.mulf %5, %3 : vector<16x128xf32>
    %7 = math.tanh %6 : vector<16x128xf32>
    %cst_4 = arith.constant 5.000000e-01 : f32
    %8 = vector.broadcast %cst_4 : f32 to vector<16x128xf32>
    %9 = arith.mulf %8, %7 : vector<16x128xf32>
    %cst_5 = arith.constant 5.000000e-01 : f32
    %10 = vector.broadcast %cst_5 : f32 to vector<16x128xf32>
    %11 = arith.addf %9, %10 : vector<16x128xf32>
    %12 = arith.mulf %11, %4 : vector<16x128xf32>
    %13 = arith.addf %11, %4 : vector<16x128xf32>
    %c0_6 = arith.constant 0 : index
    %c0_7 = arith.constant 0 : index
    %14 = vector.load %arg6[%c0_6, %c0_7] : memref<8x128xf32, #tpu.memory_space<vmem>>, vector<8x128xf32>
    %15 = vector.shape_cast %12 : vector<16x128xf32> to vector<2x8x128xf32>
    %cst_8 = arith.constant dense<0.000000e+00> : vector<8x128xf32>
    %16 = vector.multi_reduction <add>, %15, %cst_8 [0] : vector<2x8x128xf32> to vector<8x128xf32>
    %17 = arith.addf %14, %16 : vector<8x128xf32>
    %c0_9 = arith.constant 0 : index
    %c0_10 = arith.constant 0 : index
    %18 = vector.load %arg6[%c0_9, %c0_10] : memref<8x128xf32, #tpu.memory_space<vmem>>, vector<8x128xf32>
    tpu.vector_store %arg6[%c0_9, %c0_10], %17 {strides = array<i32>} : memref<8x128xf32, #tpu.memory_space<vmem>>, vector<8x128xf32>,
    %c0_11 = arith.constant 0 : index
    %c0_12 = arith.constant 0 : index
    %19 = vector.load %arg7[%c0_11, %c0_12] : memref<8x128xf32, #tpu.memory_space<vmem>>, vector<8x128xf32>
    %20 = vector.shape_cast %13 : vector<16x128xf32> to vector<2x8x128xf32>
    %cst_13 = arith.constant dense<0.000000e+00> : vector<8x128xf32>
    %21 = vector.multi_reduction <add>, %20, %cst_13 [0] : vector<2x8x128xf32> to vector<8x128xf32>
    %22 = arith.addf %19, %21 : vector<8x128xf32>
    %c0_14 = arith.constant 0 : index
    %c0_15 = arith.constant 0 : index
    %23 = vector.load %arg7[%c0_14, %c0_15] : memref<8x128xf32, #tpu.memory_space<vmem>>, vector<8x128xf32>
    tpu.vector_store %arg7[%c0_14, %c0_15], %22 {strides = array<i32>} : memref<8x128xf32, #tpu.memory_space<vmem>>, vector<8x128xf32>,
    %c0_i32_16 = arith.constant 0 : i32
    %24 = arith.cmpi eq, %arg1, %c0_i32_16 : i32
    %25 = arith.extui %24 : i1 to i32
    %c0_i32_17 = arith.constant 0 : i32
    %26 = arith.cmpi ne, %25, %c0_i32_17 : i32
    scf.if %26 {
      %c0_18 = arith.constant 0 : index
      %c0_19 = arith.constant 0 : index
      %27 = vector.load %arg6[%c0_18, %c0_19] : memref<8x128xf32, #tpu.memory_space<vmem>>, vector<8x128xf32>
      %c0_20 = arith.constant 0 : index
      %c0_21 = arith.constant 0 : index
      %c0_22 = arith.constant 0 : index
      %28 = vector.load %arg4[%c0_20, %c0_21, %c0_22] : memref<1x8x128xf32, #tpu.memory_space<vmem>>, vector<1x8x128xf32>
      %29 = vector.shape_cast %28 : vector<1x8x128xf32> to vector<8x128xf32>
      %30 = vector.shape_cast %27 : vector<8x128xf32> to vector<1x8x128xf32>
      tpu.vector_store %arg4[%c0_20, %c0_21, %c0_22], %30 {strides = array<i32>} : memref<1x8x128xf32, #tpu.memory_space<vmem>>, vector<1x8x128xf32>,
      %c0_23 = arith.constant 0 : index
      %c0_24 = arith.constant 0 : index
      %31 = vector.load %arg7[%c0_23, %c0_24] : memref<8x128xf32, #tpu.memory_space<vmem>>, vector<8x128xf32>
      %c0_25 = arith.constant 0 : index
      %c0_26 = arith.constant 0 : index
      %c0_27 = arith.constant 0 : index
      %32 = vector.load %arg5[%c0_25, %c0_26, %c0_27] : memref<1x8x128xf32, #tpu.memory_space<vmem>>, vector<1x8x128xf32>
      %33 = vector.shape_cast %32 : vector<1x8x128xf32> to vector<8x128xf32>
      %34 = vector.shape_cast %31 : vector<8x128xf32> to vector<1x8x128xf32>
      tpu.vector_store %arg5[%c0_25, %c0_26, %c0_27], %34 {strides = array<i32>} : memref<1x8x128xf32, #tpu.memory_space<vmem>>, vector<1x8x128xf32>,
    } else {
    }
    return
  }
  func.func @transform_0(%arg0: i32, %arg1: i32) -> (i32, i32) {
    %c1_i32 = arith.constant 1 : i32
    %0 = arith.muli %arg0, %c1_i32 : i32
    %1 = arith.addi %0, %arg1 : i32
    %c0_i32 = arith.constant 0 : i32
    %2 = arith.minsi %1, %c0_i32 : i32
    %c0_i32_0 = arith.constant 0 : i32
    %c0_i32_1 = arith.constant 0 : i32
    return %2, %c0_i32_0 : i32, i32
  }
  func.func @transform_1(%arg0: i32, %arg1: i32) -> (i32, i32) {
    %c1_i32 = arith.constant 1 : i32
    %0 = arith.muli %arg0, %c1_i32 : i32
    %1 = arith.addi %0, %arg1 : i32
    %c0_i32 = arith.constant 0 : i32
    %2 = arith.minsi %1, %c0_i32 : i32
    %c0_i32_0 = arith.constant 0 : i32
    %c0_i32_1 = arith.constant 0 : i32
    return %2, %c0_i32_0 : i32, i32
  }
  func.func @transform_2(%arg0: i32, %arg1: i32) -> (i32, i32, i32) {
    %c0_i32 = arith.constant 0 : i32
    %c0_i32_0 = arith.constant 0 : i32
    %c0_i32_1 = arith.constant 0 : i32
    return %arg0, %c0_i32, %c0_i32_0 : i32, i32, i32
  }
  func.func @transform_3(%arg0: i32, %arg1: i32) -> (i32, i32, i32) {
    %c0_i32 = arith.constant 0 : i32
    %c0_i32_0 = arith.constant 0 : i32
    %c0_i32_1 = arith.constant 0 : i32
    return %arg0, %c0_i32, %c0_i32_0 : i32, i32, i32
  }
}

</mosaic_0001>

<llo_original>
// kernel: tpu_custom_call.1
$region0: #{tpu_custom_call.1}
  #allocation0 [shape = 'u32[]', space=smem, size = 0x4, offset = 0x4, fixed_abs, tag = 'smem constant byte address 0x4 - core index']
  #allocation1 [shape = 'u32[144,128]{1,0:T(1,128)}', space=vmem, size = 0x12000, scoped, tag = 'internal scratch']
  #allocation2 [shape = 'f32[8,128]{1,0:T(8,128)}', space=vmem, size = 0x1000, scoped, tag = 'scratch operand']
  #allocation3 [shape = 'f32[8,128]{1,0:T(8,128)}', space=vmem, size = 0x1000, scoped, tag = 'scratch operand']
  %s0 = inlined_call_operand.hbm [shape: f32[16,128], index: 0, kind: input, shape index: {}]
  %s1 = inlined_call_operand.hbm [shape: f32[16,128], index: 1, kind: input, shape index: {}]
  %s2 = inlined_call_operand.hbm [shape: f32[1,8,128], index: 2, kind: output, shape index: {0}]
  %s3 = inlined_call_operand.hbm [shape: f32[1,8,128], index: 3, kind: output, shape index: {1}]
  %4 = xla_tuple %s2, %s3
  %s5 = sld [smem:[#allocation0]]
  $region42: #{tpu_custom_call.1} parent=0
    _
  %s7 = ssub.s32 1, %s5
  %s8 = scalar_select 0, %s7, %s5
  $region1: #{tpu_custom_call.1} parent=0
    #allocation4 [shape = 'u8[8192]{0}', space=vmem, size = 0x2000, scoped, tag = 'input window, operand 0, single buffered']
    #allocation5 [shape = 's32[1]{0}', space=sflag, size = 0x4, scoped, tag = 'scoped memory for tpu_custom_call.1']
    #allocation6 [shape = 's32[1]{0}', space=sflag, size = 0x4, scoped, tag = 'scoped memory for tpu_custom_call.1']
    #allocation7 [shape = 'u8[8192]{0}', space=vmem, size = 0x2000, scoped, tag = 'input window, operand 1, single buffered']
    #allocation8 [shape = 's32[1]{0}', space=sflag, size = 0x4, scoped, tag = 'scoped memory for tpu_custom_call.1']
    #allocation9 [shape = 'u8[4096]{0}', space=vmem, size = 0x1000, scoped, tag = 'output window, operand 0, single buffered']
    #allocation10 [shape = 'u8[4096]{0}', space=vmem, size = 0x1000, scoped, tag = 'output window, operand 1, single buffered']
    #allocation11 [shape = 's32[1]{0}', space=sflag, size = 0x4, scoped, tag = 'scoped memory for tpu_custom_call.1']
    %9 = vsyncpa [#allocation5], 0
    %10 = vsyncpa [#allocation8], 0
    %11 = vsyncpa [#allocation6], 0
    %12 = vsyncpa [#allocation11], 0
    // Predicated region
    $region2: #{tpu_custom_call.1} parent=1 // pred_check
      _
    $region3: #{tpu_custom_call.1} parent=1 // pred_check_branch
      %14 = sbr.rel (0) target = $region5
    $region4: #{tpu_custom_call.1} parent=1 // pred_region
      %s15 = sadd.s32 0, 0
      %p16 = scmp.lt.s32.totalorder %s15, 0
      %s17 = scalar_select %p16, %s15, 0
      %s18 = smul.u32 2, %s17
      %s20 = ssub.s32 256, 256
      %21 = vsyncadd [#allocation5], %s20
      %s22 = smul.addr %s18, 128
      %s23 = scalar_lea.hbm %s0, %s22
      %s24 = sshll.u32 [#allocation4], 4
      %s25 = int_to_ptr.vmem [resolvable:$true] %s24
      %30 = dma.hbm_to_vmem [thread:$0]  %s23, 256, %s25, [#allocation5], 128, 128, 8
    $region5: #{tpu_custom_call.1} parent=1 // pred_fallthru
      _
    // Predicated region
    $region6: #{tpu_custom_call.1} parent=1 // pred_check
      _
    $region7: #{tpu_custom_call.1} parent=1 // pred_check_branch
      %32 = sbr.rel (0) target = $region9
    $region8: #{tpu_custom_call.1} parent=1 // pred_region
      %s33 = sadd.s32 0, 0
      %p34 = scmp.lt.s32.totalorder %s33, 0
      %s35 = scalar_select %p34, %s33, 0
      %s36 = smul.u32 2, %s35
      %s38 = ssub.s32 256, 256
      %39 = vsyncadd [#allocation8], %s38
      %s40 = smul.addr %s36, 128
      %s41 = scalar_lea.hbm %s1, %s40
      %s42 = sshll.u32 [#allocation7], 4
      %s43 = int_to_ptr.vmem [resolvable:$true] %s42
      %48 = dma.hbm_to_vmem [thread:$0]  %s41, 256, %s43, [#allocation8], 128, 128, 8
    $region9: #{tpu_custom_call.1} parent=1 // pred_fallthru
      _
    // Predicated region
    $region10: #{tpu_custom_call.1} parent=1 // pred_check
      _
    $region11: #{tpu_custom_call.1} parent=1 // pred_check_branch
      %50 = sbr.rel (0) target = $region13
    $region12: #{tpu_custom_call.1} parent=1 // pred_region
      %51 = dma.done [#allocation5], 256
    $region13: #{tpu_custom_call.1} parent=1 // pred_fallthru
      _
    // Predicated region
    $region14: #{tpu_custom_call.1} parent=1 // pred_check
      _
    $region15: #{tpu_custom_call.1} parent=1 // pred_check_branch
      %53 = sbr.rel (0) target = $region17
    $region16: #{tpu_custom_call.1} parent=1 // pred_region
      %54 = dma.done [#allocation8], 256
    $region17: #{tpu_custom_call.1} parent=1 // pred_fallthru
      _
    %s55 = sadd.s32 0, 0
    %p56 = scmp.lt.s32.totalorder %s55, 0
    %s57 = scalar_select %p56, %s55, 0
    %s58 = smul.u32 2, %s57
    %s59 = sadd.s32 0, 0
    %p60 = scmp.lt.s32.totalorder %s59, 0
    %s61 = scalar_select %p60, %s59, 0
    %s62 = smul.u32 2, %s61
    %p63 = scmp.eq.s32.totalorder 0, 0
    // Predicated region
    $region18: #{tpu_custom_call.1} parent=1 // pred_check
      %p64 = pneg %p63
    $region19: #{tpu_custom_call.1} parent=1 // pred_check_branch
      %66 = sbr.rel (%p64) target = $region21
    $region20: #{tpu_custom_call.1} parent=1 // pred_region
      %67 = vst [vmem:[#allocation2] sm:$0xff] 0.0
      %68 = vst [vmem:[#allocation3] sm:$0xff] 0.0
    $region21: #{tpu_custom_call.1} parent=1 // pred_fallthru
      _
    %v69 = vld [vmem:[#allocation4] sm:$0xff]
    %v70 = vld [vmem:[#allocation4 + $0x8] sm:$0xff]
    %v71 = vld [vmem:[#allocation7] sm:$0xff]
    %v72 = vld [vmem:[#allocation7 + $0x8] sm:$0xff]
    %v73 = vmul.f32 %v69, 0.5
    %v74 = vmul.f32 %v70, 0.5
    %v75 = vtanh.pop %v73
    %v76 = vtanh.pop %v74
    %v77 = vmul.f32 %v75, 0.5
    %v78 = vmul.f32 %v76, 0.5
    %v79 = vadd.f32 %v77, 0.5
    %v80 = vadd.f32 %v78, 0.5
    %v81 = vmul.f32 %v79, %v71
    %v82 = vmul.f32 %v80, %v72
    %v83 = vadd.f32 %v79, %v71
    %v84 = vadd.f32 %v80, %v72
    %v85 = vld [vmem:[#allocation2] sm:$0xff]
    %v86 = vadd.f32 %v81, %v82
    %v87 = vadd.f32 %v85, %v86
    %88 = vst [vmem:[#allocation2] sm:$0xff] %v87
    %v89 = vld [vmem:[#allocation3] sm:$0xff]
    %v90 = vadd.f32 %v83, %v84
    %v91 = vadd.f32 %v89, %v90
    %92 = vst [vmem:[#allocation3] sm:$0xff] %v91
    // Predicated region
    $region22: #{tpu_custom_call.1} parent=1 // pred_check
      %p93 = pneg %p63
    $region23: #{tpu_custom_call.1} parent=1 // pred_check_branch
      %95 = sbr.rel (%p93) target = $region25
    $region24: #{tpu_custom_call.1} parent=1 // pred_region
      %v96 = vld [vmem:[#allocation2] sm:$0xff]
      %97 = vst [vmem:[#allocation9] sm:$0xff] %v96
      %v98 = vld [vmem:[#allocation3] sm:$0xff]
      %99 = vst [vmem:[#allocation10] sm:$0xff] %v98
    $region25: #{tpu_custom_call.1} parent=1 // pred_fallthru
      _
    // Predicated region
    $region26: #{tpu_custom_call.1} parent=1 // pred_check
      _
    $region27: #{tpu_custom_call.1} parent=1 // pred_check_branch
      %101 = sbr.rel (0) target = $region29
    $region28: #{tpu_custom_call.1} parent=1 // pred_region
      %s103 = ssub.s32 128, 128
      %104 = vsyncadd [#allocation6], %s103
      %s106 = sshll.u32 [#allocation9], 4
      %s107 = int_to_ptr.vmem [resolvable:$true] %s106
      %109 = dma.vmem_to_hbm [thread:$0]  %s107, 128, %s2, [#allocation6]
    $region29: #{tpu_custom_call.1} parent=1 // pred_fallthru
      _
    // Predicated region
    $region30: #{tpu_custom_call.1} parent=1 // pred_check
      _
    $region31: #{tpu_custom_call.1} parent=1 // pred_check_branch
      %111 = sbr.rel (0) target = $region33
    $region32: #{tpu_custom_call.1} parent=1 // pred_region
      %s113 = ssub.s32 128, 128
      %114 = vsyncadd [#allocation11], %s113
      %s116 = sshll.u32 [#allocation10], 4
      %s117 = int_to_ptr.vmem [resolvable:$true] %s116
      %119 = dma.vmem_to_hbm [thread:$0]  %s117, 128, %s3, [#allocation11]
    $region33: #{tpu_custom_call.1} parent=1 // pred_fallthru
      _
    // Predicated region
    $region34: #{tpu_custom_call.1} parent=1 // pred_check
      _
    $region35: #{tpu_custom_call.1} parent=1 // pred_check_branch
      %121 = sbr.rel (0) target = $region37
    $region36: #{tpu_custom_call.1} parent=1 // pred_region
      %122 = dma.done [#allocation6], 128
    $region37: #{tpu_custom_call.1} parent=1 // pred_fallthru
      _
    // Predicated region
    $region38: #{tpu_custom_call.1} parent=1 // pred_check
      _
    $region39: #{tpu_custom_call.1} parent=1 // pred_check_branch
      %124 = sbr.rel (0) target = $region41
    $region40: #{tpu_custom_call.1} parent=1 // pred_region
      %125 = dma.done [#allocation11], 128
    $region41: #{tpu_custom_call.1} parent=1 // pred_fallthru
      _
    %126 = vsyncpa [#allocation5], 1
    %127 = vsyncpa [#allocation8], 1
    %128 = vsyncpa [#allocation6], 1
    %129 = vsyncpa [#allocation11], 1

</llo_original>
